<compile_context>
chip_gen: v7x
topology: tpu7x:2x2x1
jax: 0.10.0
libtpu: 0.0.40
codegen_flags: <defaults>
</compile_context>

<pallas_src>
import functools

import jax
import jax.numpy as jnp
import numpy as np
from jax.experimental import pallas as pl
from jax.experimental.pallas import tpu as pltpu


# ---------------------------------------------------------------------------
# Kernel 1: Chebyshev supports (streamed stores, minimal live temporaries)
# ---------------------------------------------------------------------------
def prep_kernel(adj_ref, sup_ref, *, cheb_k):
    adj = adj_ref[...]                                    # (N, E) f32
    n = adj.shape[0]
    out_dtype = sup_ref.dtype

    # ADJ = softmax(relu(adj @ adj^T), axis=1); contract dim 1 of both operands
    # so the MXU consumes adj directly (no XLU transpose pass).
    scores = jax.lax.dot_general(
        adj, adj,
        dimension_numbers=(((1,), (1,)), ((), ())),
        preferred_element_type=jnp.float32,
    )                                                     # (N, N)
    scores = jnp.maximum(scores, 0.0)
    m = jnp.max(scores, axis=1, keepdims=True)
    e = jnp.exp(scores - m)
    ADJ = e / jnp.sum(e, axis=1, keepdims=True)           # (N, N)

    # identity via 2-D iota (TPU needs >=2D iota)
    rr = jax.lax.broadcasted_iota(jnp.int32, (n, n), 0)
    cc = jax.lax.broadcasted_iota(jnp.int32, (n, n), 1)
    eye = (rr == cc).astype(jnp.float32)

    # Stream each support to HBM-bound output as it is produced; keep only
    # ADJ / T_{k-1} / T_{k-2} live (reduces peak VMEM / vreg spills).
    sup_ref[0] = eye.astype(out_dtype)
    if cheb_k > 1:
        sup_ref[1] = ADJ.astype(out_dtype)
    t_prev2, t_prev = eye, ADJ
    for k in range(2, cheb_k):
        t_cur = (
            2.0 * jnp.dot(ADJ, t_prev, preferred_element_type=jnp.float32)
            - t_prev2
        )
        sup_ref[k] = t_cur.astype(out_dtype)
        t_prev2, t_prev = t_prev, t_cur
    # TODO(synk): for very large N on v7x (64 MiB VMEM/TC) this single-shot prep
    # should be row/k-tiled; it is a scalability limit, not a correctness one.


# ---------------------------------------------------------------------------
# Kernel 2 (fused): propagation + pool contraction + embed reduction
# ---------------------------------------------------------------------------
def fused_kernel(sup_ref, xt_ref, adj_ref, wpool_ref, bpool_ref, o_ref,
                 *, cheb_k, batch, chan, embed, hid):
    """Per node tile.

    sup_ref  : (K, NT, Np)   Chebyshev support rows for this node tile
    xt_ref   : (Np, B*C)     x transposed, batch folded into lanes (grid-invariant)
    adj_ref  : (NT, E)       node-embedding rows for this tile
    wpool_ref: (K*C, E*H)    weights_pool, rows (k,c)-major, lanes (e,h)-major
    bpool_ref: (E, H)        bias_pool
    o_ref    : (B, NT, H)    output slab, written directly into (B, N, H)
    """
    k_dim, nt, npad = sup_ref.shape

    # 1) propagation: ONE lane-dense MXU matmul for all K orders and batches.
    sup_flat = sup_ref[...].reshape(k_dim * nt, npad)      # free leading-dim merge
    xg = jnp.dot(sup_flat, xt_ref[...],
                 preferred_element_type=jnp.float32)       # (K*NT, B*C) f32

    # 2) relayout rows (k,n)/lanes (b,c) -> rows (b,n)/lanes (k,c).
    #    (k and b must swap matmul sides, so a relayout is unavoidable; done as
    #     B*K static slices feeding one big matmul instead of per-node einsums.)
    xg3 = xg.reshape(cheb_k, nt, batch * chan)             # free leading-dim split
    rows = []
    for b in range(batch):
        rows.append(
            jnp.concatenate(
                [xg3[k][:, b * chan:(b + 1) * chan] for k in range(cheb_k)],
                axis=-1,
            )                                              # (NT, K*C)
        )
    xg_nb = jnp.concatenate(rows, axis=0)                  # (B*NT, K*C), b-major rows

    # 3) pool contraction: ONE dense MXU matmul against the small weight pool
    #    (the per-node (N, K*C*H) weights are never materialized or streamed).
    z = jnp.dot(xg_nb.astype(wpool_ref.dtype), wpool_ref[...],
                preferred_element_type=jnp.float32)        # (B*NT, E*H)
    z3 = z.reshape(batch, nt, embed * hid)                 # free leading-dim split

    # 4) embed reduction on the VPU (E small), bias hoisted, single store.
    adj_tile = adj_ref[...]                                # (NT, E)
    bias = jnp.dot(adj_tile, bpool_ref[...],
                   preferred_element_type=jnp.float32)     # (NT, H)
    acc = jnp.zeros((batch, nt, hid), jnp.float32)
    for e in range(embed):
        acc = acc + adj_tile[:, e:e + 1][None, :, :] * z3[..., e * hid:(e + 1) * hid]
    o_ref[...] = acc + bias[None, :, :]                    # one (B, NT, H) store


# ---------------------------------------------------------------------------
# Node-tile selection: VMEM-aware, prefers >= 2 grid steps (v7x megacore)
# ---------------------------------------------------------------------------
def _round_up(x, m):
    return ((x + m - 1) // m) * m


def _pick_node_tile(n, batch, chan, hid, embed, cheb_k, mm_bytes,
                    budget_bytes=44 * 1024 * 1024):
    kc = cheb_k * chan
    eh = embed * hid
    cap = max(8, _round_up(n, 8))
    best_any = None
    best_multi = None
    for nt in (512, 256, 128, 64, 32, 16, 8):
        if nt > cap:
            continue
        steps = -(-n // nt)
        n_pad = steps * nt
        # double-buffered pipeline blocks
        vmem = 2 * cheb_k * nt * n_pad * mm_bytes          # supports block
        vmem += 2 * batch * nt * hid * 4                   # output block
        vmem += 2 * nt * embed * 4                         # adj rows
        # grid-invariant operands (fetched once; still double-buffered)
        vmem += 2 * n_pad * batch * chan * mm_bytes        # x^T
        vmem += 2 * kc * eh * mm_bytes + 2 * embed * hid * 4
        # in-kernel f32 temporaries (xg, XG, Z, acc)
        vmem += (cheb_k * nt * batch * chan + batch * nt * kc
                 + batch * nt * eh + batch * nt * hid) * 4
        if vmem > budget_bytes:
            continue
        if best_any is None:
            best_any = nt
        if steps >= 2 and best_multi is None:
            best_multi = nt
    if best_multi is not None:
        return best_multi
    if best_any is not None:
        return best_any
    return 8


# ---------------------------------------------------------------------------
# Wrapper
# ---------------------------------------------------------------------------
def gconv_forward(x, adj, weights_pool, bias_pool, cheb_k, use_bf16_matmul=False):
    B, N, C = x.shape
    E = adj.shape[1]
    K = cheb_k
    H = bias_pool.shape[1]
    mm_dtype = jnp.bfloat16 if use_bf16_matmul else jnp.float32
    mm_bytes = 2 if use_bf16_matmul else 4

    # --- kernel 1: Chebyshev supports (un-gridded: single VMEM residency, no
    # pipeline double-buffering of the K*N*N output) ---
    supports = pl.pallas_call(
        functools.partial(prep_kernel, cheb_k=K),
        out_shape=jax.ShapeDtypeStruct((K, N, N), mm_dtype),
    )(adj)

    # --- node tiling (+ zero padding for N not a multiple of the tile) ---
    NT = _pick_node_tile(N, B, C, H, E, K, mm_bytes)
    n_tiles = -(-N // NT)
    N_pad = n_tiles * NT

    # small glue (XLA, parameter-sized or one-time layout changes):
    #   x (B,N,C) -> (N, B*C): batch folded into the lane dim,
    #   weights_pool (E,K,C,H) -> (K*C, E*H): rows (k,c)-major, lanes (e,h)-major.
    xt = jnp.transpose(x, (1, 0, 2)).reshape(N, B * C).astype(mm_dtype)
    wpool_flat = jnp.transpose(weights_pool, (1, 2, 0, 3)).reshape(K * C, E * H)
    wpool_flat = wpool_flat.astype(mm_dtype)
    adj_in = adj
    if N_pad != N:
        pad = N_pad - N
        supports = jnp.pad(supports, ((0, 0), (0, pad), (0, pad)))
        xt = jnp.pad(xt, ((0, pad), (0, 0)))
        adj_in = jnp.pad(adj, ((0, pad), (0, 0)))

    # --- kernel 2: fused propagation + pool contraction, grid over node tiles ---
    out = pl.pallas_call(
        functools.partial(fused_kernel, cheb_k=K, batch=B, chan=C, embed=E, hid=H),
        grid=(n_tiles,),
        in_specs=[
            pl.BlockSpec((K, NT, N_pad), lambda i: (0, i, 0)),   # supports rows
            pl.BlockSpec((N_pad, B * C), lambda i: (0, 0)),      # x^T (resident)
            pl.BlockSpec((NT, E), lambda i: (i, 0)),             # adj rows
            pl.BlockSpec((K * C, E * H), lambda i: (0, 0)),      # weights_pool
            pl.BlockSpec((E, H), lambda i: (0, 0)),              # bias_pool
        ],
        out_specs=pl.BlockSpec((B, NT, H), lambda i: (0, i, 0)),
        out_shape=jax.ShapeDtypeStruct((B, N_pad, H), jnp.float32),
        compiler_params=pltpu.CompilerParams(
            dimension_semantics=("parallel",),
            vmem_limit_bytes=64 * 1024 * 1024,
        ),
    )(supports, xt, adj_in, wpool_flat, bias_pool)

    if N_pad != N:
        out = out[:, :N, :]
    return out  # (B, N, H) — final layout, no trailing transpose


# ---------------------------------------------------------------------------
# Pure-JAX reference (mirrors the PyTorch forward)
# ---------------------------------------------------------------------------
def gconv_ref(x, adj, weights_pool, bias_pool, cheb_k):
    n = adj.shape[0]
    ADJ = jax.nn.softmax(jnp.maximum(adj @ adj.T, 0.0), axis=1)
    sup = [jnp.eye(n, dtype=jnp.float32), ADJ]
    for _ in range(2, cheb_k):
        sup.append(2.0 * ADJ @ sup[-1] - sup[-2])
    supports = jnp.stack(sup, axis=0)
    weights = jnp.einsum("nd,dkio->nkio", adj, weights_pool)
    bias = adj @ bias_pool
    x_g = jnp.einsum("knm,bmc->bknc", supports, x)
    x_g = x_g.transpose(0, 2, 1, 3)
    return jnp.einsum("bnki,nkio->bno", x_g, weights) + bias


if __name__ == "__main__":
    # small, module-consistent shapes
    batch, node_num, inp, hid, embed, cheb_k = 2, 16, 4, 32, 8, 3

    key = jax.random.PRNGKey(0)
    k_adj, k_w, k_b, k_x = jax.random.split(key, 4)

    # deterministic synthetic parameters (PyTorch: adj ~ randn, pools uninitialized)
    adj = jax.random.normal(k_adj, (node_num, embed), dtype=jnp.float32)
    weights_pool = jax.random.normal(k_w, (embed, cheb_k, inp, hid), dtype=jnp.float32)
    bias_pool = jax.random.normal(k_b, (embed, hid), dtype=jnp.float32)

    # input x: (batch, node, channel)
    x = jax.random.normal(k_x, (batch, node_num, inp), dtype=jnp.float32)

    out = gconv_forward(x, adj, weights_pool, bias_pool, cheb_k)
    out = jax.block_until_ready(out)

    ref = gconv_ref(x, adj, weights_pool, bias_pool, cheb_k)
    np.testing.assert_allclose(np.asarray(out), np.asarray(ref), rtol=1e-4, atol=1e-4)

    print("KERNEL_OK")
</pallas_src>

<mosaic_0001>
module attributes {stable_mosaic.version = 11 : i64} {
  func.func @prep_kernel(%arg0: memref<16x8xf32, #tpu.memory_space<vmem>>, %arg1: memref<3x16x16xf32, #tpu.memory_space<vmem>>) attributes {dimension_semantics = [], scalar_prefetch = 0 : i64, scratch_operands = 0 : i64, tpu.core_type = #tpu.core_type<tc>} {
    %c0 = arith.constant 0 : index
    %c0_0 = arith.constant 0 : index
    %0 = vector.load %arg0[%c0, %c0_0] : memref<16x8xf32, #tpu.memory_space<vmem>>, vector<16x8xf32>
    %cst = arith.constant dense<0.000000e+00> : vector<16x16xf32>
    %1 = tpu.matmul %0, %0, %cst {dimension_numbers = #tpu.dot_dimension_numbers<[1], [1], [0], [0], [0, 0, 1, 0], [], []>} : vector<16x8xf32>, vector<16x8xf32>, vector<16x16xf32> -> vector<16x16xf32>
    %cst_1 = arith.constant 0.000000e+00 : f32
    %2 = vector.broadcast %cst_1 : f32 to vector<16x16xf32>
    %3 = arith.maximumf %1, %2 : vector<16x16xf32>
    %cst_2 = arith.constant dense<0xFF800000> : vector<16xf32>
    %4 = vector.multi_reduction <maximumf>, %3, %cst_2 [1] : vector<16x16xf32> to vector<16xf32>
    %5 = vector.shape_cast %4 : vector<16xf32> to vector<16x1xf32>
    %6 = vector.broadcast %5 : vector<16x1xf32> to vector<16x16xf32>
    %7 = arith.subf %3, %6 : vector<16x16xf32>
    %8 = math.exp %7 : vector<16x16xf32>
    %cst_3 = arith.constant dense<0.000000e+00> : vector<16xf32>
    %9 = vector.multi_reduction <add>, %8, %cst_3 [1] : vector<16x16xf32> to vector<16xf32>
    %10 = vector.shape_cast %9 : vector<16xf32> to vector<16x1xf32>
    %11 = vector.broadcast %10 : vector<16x1xf32> to vector<16x16xf32>
    %12 = arith.divf %8, %11 : vector<16x16xf32>
    %13 = tpu.iota {dimensions = array<i32: 0>} : vector<16x16xi32>
    %14 = tpu.iota {dimensions = array<i32: 1>} : vector<16x16xi32>
    %15 = arith.cmpi eq, %13, %14 : vector<16x16xi32>
    %16 = arith.extui %15 : vector<16x16xi1> to vector<16x16xi32>
    %17 = arith.sitofp %16 : vector<16x16xi32> to vector<16x16xf32>
    %c0_4 = arith.constant 0 : index
    %c0_5 = arith.constant 0 : index
    %c0_6 = arith.constant 0 : index
    %18 = vector.load %arg1[%c0_4, %c0_5, %c0_6] : memref<3x16x16xf32, #tpu.memory_space<vmem>>, vector<1x16x16xf32>
    %19 = vector.shape_cast %18 : vector<1x16x16xf32> to vector<16x16xf32>
    %20 = vector.shape_cast %17 : vector<16x16xf32> to vector<1x16x16xf32>
    tpu.vector_store %arg1[%c0_4, %c0_5, %c0_6], %20 {strides = array<i32>} : memref<3x16x16xf32, #tpu.memory_space<vmem>>, vector<1x16x16xf32>,
    %c1 = arith.constant 1 : index
    %c0_7 = arith.constant 0 : index
    %c0_8 = arith.constant 0 : index
    %21 = vector.load %arg1[%c1, %c0_7, %c0_8] : memref<3x16x16xf32, #tpu.memory_space<vmem>>, vector<1x16x16xf32>
    %22 = vector.shape_cast %21 : vector<1x16x16xf32> to vector<16x16xf32>
    %23 = vector.shape_cast %12 : vector<16x16xf32> to vector<1x16x16xf32>
    tpu.vector_store %arg1[%c1, %c0_7, %c0_8], %23 {strides = array<i32>} : memref<3x16x16xf32, #tpu.memory_space<vmem>>, vector<1x16x16xf32>,
    %cst_9 = arith.constant dense<0.000000e+00> : vector<16x16xf32>
    %24 = tpu.matmul %12, %12, %cst_9 {dimension_numbers = #tpu.dot_dimension_numbers<[1], [0], [0], [1], [0, 0, 1, 1], [], []>} : vector<16x16xf32>, vector<16x16xf32>, vector<16x16xf32> -> vector<16x16xf32>
    %cst_10 = arith.constant 2.000000e+00 : f32
    %25 = vector.broadcast %cst_10 : f32 to vector<16x16xf32>
    %26 = arith.mulf %25, %24 : vector<16x16xf32>
    %27 = arith.subf %26, %17 : vector<16x16xf32>
    %c2 = arith.constant 2 : index
    %c0_11 = arith.constant 0 : index
    %c0_12 = arith.constant 0 : index
    %28 = vector.load %arg1[%c2, %c0_11, %c0_12] : memref<3x16x16xf32, #tpu.memory_space<vmem>>, vector<1x16x16xf32>
    %29 = vector.shape_cast %28 : vector<1x16x16xf32> to vector<16x16xf32>
    %30 = vector.shape_cast %27 : vector<16x16xf32> to vector<1x16x16xf32>
    tpu.vector_store %arg1[%c2, %c0_11, %c0_12], %30 {strides = array<i32>} : memref<3x16x16xf32, #tpu.memory_space<vmem>>, vector<1x16x16xf32>,
    return
  }
}

</mosaic_0001>

<llo_original>
// kernel: tpu_custom_call.1
$region0: #{tpu_custom_call.1}
  #allocation0 [shape = 'u32[]', space=smem, size = 0x4, offset = 0x4, fixed_abs, tag = 'smem constant byte address 0x4 - core index']
  #allocation1 [shape = 'u32[144,128]{1,0:T(1,128)}', space=vmem, size = 0x12000, scoped, tag = 'internal scratch']
  %s0 = inlined_call_operand.vmem [shape: f32[16,8], index: 0, kind: input, shape index: {}]
  %s1 = inlined_call_operand.hbm [shape: f32[3,16,16], index: 1, kind: output, shape index: {}]
  %s2 = sld [smem:[#allocation0]]
  $region14: #{tpu_custom_call.1} parent=0
    _
  %s4 = ssub.s32 1, %s2
  %s5 = scalar_select 0, %s4, %s2
  $region1: #{tpu_custom_call.1} parent=0
    #allocation2 [shape = 'u8[24576]{0}', space=vmem, size = 0x6000, scoped, tag = 'output window, operand 0, single buffered']
    #allocation3 [shape = 's32[1]{0}', space=sflag, size = 0x4, scoped, tag = 'scoped memory for tpu_custom_call.1']
    %6 = vsyncpa [#allocation3], 0
    // Predicated region
    $region2: #{tpu_custom_call.1} parent=1 // pred_check
      _
    $region3: #{tpu_custom_call.1} parent=1 // pred_check_branch
      %8 = sbr.rel (0) target = $region5
    $region4: #{tpu_custom_call.1} parent=1 // pred_region
      _
    $region5: #{tpu_custom_call.1} parent=1 // pred_fallthru
      _
    %v9 = vld [vmem:[%s0] sm:$0xff]
    %v10 = vld [vmem:[%s0 + $0x8] sm:$0xff]
    %vm11 = vcmask 64512
    %v13 = vsel %vm11, %v9, 0
    %v16 = vsel %vm11, %v10, 0
    %18 = vmatprep.subr.mxu0 0.0
    %19 = vmatpush1.xpose.msra.mxu0 %v13
    %20 = vmatprep.subr.mxu0 0.0
    %21 = vmatpush1.xpose.msra.mxu0 %v16
    %22 = vmatprep.subr.mxu0 0.0
    %23 = vmatpush1.xpose.msra.mxu0 0.0
    %24 = vmatprep.subr.mxu0 0.0
    %25 = vmatpush1.xpose.msra.mxu0 0.0
    %26 = vmatprep.subr.mxu0 0.0
    %27 = vmatpush1.xpose.msra.mxu0 0.0
    %28 = vmatprep.subr.mxu0 0.0
    %29 = vmatpush1.xpose.msra.mxu0 0.0
    %30 = vmatprep.subr.mxu0 0.0
    %31 = vmatpush1.xpose.msra.mxu0 0.0
    %32 = vmatprep.subr.mxu0 0.0
    %33 = vmatpush1.xpose.msra.mxu0 0.0
    %34 = vmatprep.subr.mxu0 0.0
    %35 = vmatpush1.xpose.msra.mxu0 0.0
    %36 = vmatprep.subr.mxu0 0.0
    %37 = vmatpush1.xpose.msra.mxu0 0.0
    %38 = vmatprep.subr.mxu0 0.0
    %39 = vmatpush1.xpose.msra.mxu0 0.0
    %40 = vmatprep.subr.mxu0 0.0
    %41 = vmatpush1.xpose.msra.mxu0 0.0
    %42 = vmatprep.subr.mxu0 0.0
    %43 = vmatpush1.xpose.msra.mxu0 0.0
    %44 = vmatprep.subr.mxu0 0.0
    %45 = vmatpush1.xpose.msra.mxu0 0.0
    %46 = vmatprep.subr.mxu0 0.0
    %47 = vmatpush1.xpose.msra.mxu0 0.0
    %48 = vmatprep.subr.mxu0 0.0
    %49 = vmatpush1.xpose.msra.mxu0 0.0
    %50 = vmatprep.subr.mxu0 0.0
    %51 = vmatpush1.xpose.msra.mxu0 0.0
    %52 = vmatprep.subr.mxu0 0.0
    %53 = vmatpush1.xpose.msra.mxu0 0.0
    %54 = vmatprep.subr.mxu0 0.0
    %55 = vmatpush1.xpose.msra.mxu0 0.0
    %56 = vmatprep.subr.mxu0 0.0
    %57 = vmatpush1.xpose.msra.mxu0 0.0
    %58 = vmatprep.subr.mxu0 0.0
    %59 = vmatpush1.xpose.msra.mxu0 0.0
    %60 = vmatprep.subr.mxu0 0.0
    %61 = vmatpush1.xpose.msra.mxu0 0.0
    %62 = vmatprep.subr.mxu0 0.0
    %63 = vmatpush1.xpose.msra.mxu0 0.0
    %64 = vmatprep.subr.mxu0 0.0
    %65 = vmatpush1.xpose.msra.mxu0 0.0
    %66 = vmatprep.subr.mxu0 0.0
    %67 = vmatpush1.xpose.msra.mxu0 0.0
    %68 = vmatprep.subr.mxu0 0.0
    %69 = vmatpush1.xpose.msra.mxu0 0.0
    %70 = vmatprep.subr.mxu0 0.0
    %71 = vmatpush1.xpose.msra.mxu0 0.0
    %72 = vmatprep.subr.mxu0 0.0
    %73 = vmatpush1.xpose.msra.mxu0 0.0
    %74 = vmatprep.subr.mxu0 0.0
    %75 = vmatpush1.xpose.msra.mxu0 0.0
    %76 = vmatprep.subr.mxu0 0.0
    %77 = vmatpush1.xpose.msra.mxu0 0.0
    %78 = vmatprep.subr.mxu0 0.0
    %79 = vmatpush1.xpose.msra.mxu0 0.0
    %80 = vmatprep.subr.mxu0 0.0
    %81 = vmatpush1.xpose.msra.mxu0 0.0
    %82 = vmatprep.mubr.f32.mxu0 0.0
    %83 = vmatmul.mubr.f32.gmra.mrb[0].mxu0 %v13
    %v84 = vpop.f32.mrb[0].mxu0
    %v85 = vadd.f32 0.0, %v84
    %v86 = vpop.f32.mrb[0].mxu0
    %87 = vmatprep.mubr.f32.mxu0 0.0
    %88 = vmatmul.mubr.f32.gmra.mrb[0].mxu0 %v16
    %v89 = vpop.f32.mrb[0].mxu0
    %v90 = vadd.f32 0.0, %v89
    %v91 = vpop.f32.mrb[0].mxu0
    %92 = vdwg.mxu0
    %v93 = vmax.f32 %v85, 0.0
    %v94 = vmax.f32 %v90, 0.0
    %vm95 = vcmask 130048
    %v96 = vsel %vm95, %v93, -inf
    %97 = vmax.xlane.f32.xlu0 %v96
    %v98 = vpop.xlane.xlu0 %97
    %v99 = vsel %vm95, %v94, -inf
    %100 = vmax.xlane.f32.xlu0 %v99
    %v101 = vpop.xlane.xlu0 %100
    %v102 = vsub.f32 %v93, %v98
    %v103 = vsub.f32 %v94, %v101
    %v104 = vmul.f32 %v102, 1.442695
    %v105 = vpow.pop %v104
    %v106 = vmul.f32 %v103, 1.442695
    %v107 = vpow.pop %v106
    %v108 = vsel %vm95, %v105, 0.0
    %109 = vadd.xlane.f32.xlu0 %v108
    %v110 = vpop.xlane.xlu0 %109
    %v111 = vsel %vm95, %v107, 0.0
    %112 = vadd.xlane.f32.xlu0 %v111
    %v113 = vpop.xlane.xlu0 %112
    %v114 = vrcp.pop %v110
    %v115 = vmul.f32 %v105, %v114
    %v116 = vrcp.pop %v113
    %v117 = vmul.f32 %v107, %v116
    %v118 = vlaneseq
    %v119 = vshrl.u32 %v118, 7
    %v120 = vadd.s32 %v119, 8
    %v121 = vlaneseq
    %v122 = vand.u32 %v121, 127
    %vm123 = vcmp.eq.s32.totalorder %v119, %v122
    %vm124 = vcmp.eq.s32.totalorder %v120, %v122
    %v125 = vsel %vm123, 1, 0
    %v126 = vsel %vm124, 1, 0
    %v127 = vcvt.s32.f32 %v125
    %v128 = vcvt.s32.f32 %v126
    %129 = vst.msk [vmem:[#allocation2] sm:$0xff] %vm95, %v127
    %130 = vst.msk [vmem:[#allocation2 + $0x8] sm:$0xff] %vm95, %v128
    %s131 = scalar_lea.vmem [#allocation2], 16
    %132 = vst.msk [vmem:[%s131] sm:$0xff] %vm95, %v115
    %133 = vst.msk [vmem:[%s131 + $0x8] sm:$0xff] %vm95, %v117
    %v135 = vsel %vm95, %v115, 0
    %v138 = vsel %vm95, %v117, 0
    %140 = vmatprep.subr.mxu0 0.0
    %141 = vmatpush1.msra.mxu0 %v115
    %142 = vmatprep.subr.mxu0 0.0
    %143 = vmatpush1.msra.mxu0 %v117
    %144 = vmatprep.subr.mxu0 0.0
    %145 = vmatpush1.msra.mxu0 0.0
    %146 = vmatprep.subr.mxu0 0.0
    %147 = vmatpush1.msra.mxu0 0.0
    %148 = vmatprep.subr.mxu0 0.0
    %149 = vmatpush1.msra.mxu0 0.0
    %150 = vmatprep.subr.mxu0 0.0
    %151 = vmatpush1.msra.mxu0 0.0
    %152 = vmatprep.subr.mxu0 0.0
    %153 = vmatpush1.msra.mxu0 0.0
    %154 = vmatprep.subr.mxu0 0.0
    %155 = vmatpush1.msra.mxu0 0.0
    %156 = vmatprep.subr.mxu0 0.0
    %157 = vmatpush1.msra.mxu0 0.0
    %158 = vmatprep.subr.mxu0 0.0
    %159 = vmatpush1.msra.mxu0 0.0
    %160 = vmatprep.subr.mxu0 0.0
    %161 = vmatpush1.msra.mxu0 0.0
    %162 = vmatprep.subr.mxu0 0.0
    %163 = vmatpush1.msra.mxu0 0.0
    %164 = vmatprep.subr.mxu0 0.0
    %165 = vmatpush1.msra.mxu0 0.0
    %166 = vmatprep.subr.mxu0 0.0
    %167 = vmatpush1.msra.mxu0 0.0
    %168 = vmatprep.subr.mxu0 0.0
    %169 = vmatpush1.msra.mxu0 0.0
    %170 = vmatprep.subr.mxu0 0.0
    %171 = vmatpush1.msra.mxu0 0.0
    %172 = vmatprep.subr.mxu0 0.0
    %173 = vmatpush1.msra.mxu0 0.0
    %174 = vmatprep.subr.mxu0 0.0
    %175 = vmatpush1.msra.mxu0 0.0
    %176 = vmatprep.subr.mxu0 0.0
    %177 = vmatpush1.msra.mxu0 0.0
    %178 = vmatprep.subr.mxu0 0.0
    %179 = vmatpush1.msra.mxu0 0.0
    %180 = vmatprep.subr.mxu0 0.0
    %181 = vmatpush1.msra.mxu0 0.0
    %182 = vmatprep.subr.mxu0 0.0
    %183 = vmatpush1.msra.mxu0 0.0
    %184 = vmatprep.subr.mxu0 0.0
    %185 = vmatpush1.msra.mxu0 0.0
    %186 = vmatprep.subr.mxu0 0.0
    %187 = vmatpush1.msra.mxu0 0.0
    %188 = vmatprep.subr.mxu0 0.0
    %189 = vmatpush1.msra.mxu0 0.0
    %190 = vmatprep.subr.mxu0 0.0
    %191 = vmatpush1.msra.mxu0 0.0
    %192 = vmatprep.subr.mxu0 0.0
    %193 = vmatpush1.msra.mxu0 0.0
    %194 = vmatprep.subr.mxu0 0.0
    %195 = vmatpush1.msra.mxu0 0.0
    %196 = vmatprep.subr.mxu0 0.0
    %197 = vmatpush1.msra.mxu0 0.0
    %198 = vmatprep.subr.mxu0 0.0
    %199 = vmatpush1.msra.mxu0 0.0
    %200 = vmatprep.subr.mxu0 0.0
    %201 = vmatpush1.msra.mxu0 0.0
    %202 = vmatprep.subr.mxu0 0.0
    %203 = vmatpush1.msra.mxu0 0.0
    %204 = vmatprep.mubr.f32.mxu0 0.0
    %205 = vmatmul.mubr.f32.gmra.mrb[0].mxu0 %v135
    %v206 = vpop.f32.mrb[0].mxu0
    %v207 = vadd.f32 0.0, %v206
    %v208 = vpop.f32.mrb[0].mxu0
    %209 = vmatprep.mubr.f32.mxu0 0.0
    %210 = vmatmul.mubr.f32.gmra.mrb[0].mxu0 %v138
    %v211 = vpop.f32.mrb[0].mxu0
    %v212 = vadd.f32 0.0, %v211
    %v213 = vpop.f32.mrb[0].mxu0
    %214 = vdwg.mxu0
    %v215 = vmul.f32 %v207, 2.0
    %v216 = vmul.f32 %v212, 2.0
    %v217 = vsub.f32 %v215, %v127
    %v218 = vsub.f32 %v216, %v128
    %s219 = scalar_lea.vmem [#allocation2], 32
    %220 = vst.msk [vmem:[%s219] sm:$0xff] %vm95, %v217
    %221 = vst.msk [vmem:[%s219 + $0x8] sm:$0xff] %vm95, %v218
    // Predicated region
    $region6: #{tpu_custom_call.1} parent=1 // pred_check
      _
    $region7: #{tpu_custom_call.1} parent=1 // pred_check_branch
      %223 = sbr.rel (0) target = $region9
    $region8: #{tpu_custom_call.1} parent=1 // pred_region
      %s225 = ssub.s32 768, 768
      %226 = vsyncadd [#allocation3], %s225
      %s227 = sshll.u32 [#allocation2], 4
      %s228 = int_to_ptr.vmem [resolvable:$true] %s227
      %233 = dma.vmem_to_hbm [thread:$0]  %s228, 768, %s1, [#allocation3], 128, 128, 8
    $region9: #{tpu_custom_call.1} parent=1 // pred_fallthru
      _
    // Predicated region
    $region10: #{tpu_custom_call.1} parent=1 // pred_check
      _
    $region11: #{tpu_custom_call.1} parent=1 // pred_check_branch
      %235 = sbr.rel (0) target = $region13
    $region12: #{tpu_custom_call.1} parent=1 // pred_region
      %236 = dma.done [#allocation3], 768
    $region13: #{tpu_custom_call.1} parent=1 // pred_fallthru
      _
    %237 = vsyncpa [#allocation3], 1

</llo_original>
